<compile_context>
chip_gen: v6e
topology: v6e:2x2x1
jax: 0.10.0
libtpu: 0.0.40
codegen_flags: <defaults>
</compile_context>

<pallas_src>
import math

import jax
import jax.numpy as jnp
from jax import lax
from jax.experimental import pallas as pl
from jax.experimental.pallas import tpu as pltpu

LANES = 128   # MXU/vreg lane width; weights are padded to this many output columns
N_SUB = 16    # round_up(10, 8): sublane-aligned row count of the transposed output


def _round_up(x: int, m: int) -> int:
    return ((x + m - 1) // m) * m


def _linreg_kernel(x_ref, w_ref, b_ref, o_ref):
    # (TB, K) @ (K, 128) on the MXU with f32 accumulation, bias broadcast-add on
    # the VPU, then an XLU transpose so the store is a small lane-dense
    # (N_SUB, TB) block instead of a (TB, 128) padded slab.
    acc = jnp.dot(x_ref[...], w_ref[...], preferred_element_type=jnp.float32)
    acc = acc + b_ref[...]                      # (TB, 128) + (1, 128)
    acc_t = acc.T                               # (128, TB): XLU is idle here
    o_ref[...] = acc_t[: o_ref.shape[0], :].astype(o_ref.dtype)


def prepare_params(weights, bias):
    """Pad parameters once at init time (NOT on every forward call).

    weights: (K, N) -> (K, 128) zero-padded so the matmul RHS is lane-dense.
    bias:    (N,)   -> (1, 128)
    """
    K, N = weights.shape
    assert N <= LANES
    w_p = jnp.pad(weights, ((0, 0), (0, LANES - N)))
    b_p = jnp.pad(bias, (0, LANES - N)).reshape(1, LANES)
    return w_p, b_p


def _default_tb_max() -> int:
    # v6e / v7x: 2048-row tiles halve per-step pipeline overhead and the
    # double-buffered footprint (~16 MiB) fits the 32 MiB default scoped VMEM.
    # v5e (16 MiB default scoped VMEM) and unknown chips stay at the safe 1024,
    # which already saturates their HBM bandwidth.
    try:
        kind = jax.devices()[0].device_kind.lower()
    except Exception:
        kind = ""
    if ("v6" in kind) or ("v7" in kind) or ("7x" in kind):
        return 2048
    return 1024


def _choose_tb(B: int, tb_max: int) -> int:
    # Small batch: one exact block -- no padding, no garbage rows, no masking cost.
    if B <= tb_max and B < 256:
        return B
    # Otherwise: at least 2 grid steps so v7x's two TensorCores both get work,
    # and a 128-multiple tile so the transposed (N_SUB, B) output stores are
    # lane-aligned.  A ragged last block is handled by Pallas masking.
    ntiles = max(pl.cdiv(B, tb_max), 2)
    return _round_up(pl.cdiv(B, ntiles), 128)


def linear_regression(x, w_p, b_p, *, n_out=10, tb_max=None):
    """Forward pass xb @ W + b.

    x:   (B, K) activations (f32 or bf16).
    w_p: (K, 128) padded weights, b_p: (1, 128) padded bias (from prepare_params).
    Returns (B, n_out).
    """
    B, K = x.shape
    assert w_p.shape == (K, LANES) and b_p.shape == (1, LANES)
    if tb_max is None:
        tb_max = _default_tb_max()

    TB = _choose_tb(B, tb_max)
    grid = (pl.cdiv(B, TB),)

    out_t = pl.pallas_call(
        _linreg_kernel,
        out_shape=jax.ShapeDtypeStruct((N_SUB, B), x.dtype),
        grid_spec=pltpu.PrefetchScalarGridSpec(
            num_scalar_prefetch=0,
            grid=grid,
            in_specs=[
                # Streamed x tile: double-buffered by Pallas across grid steps.
                pl.BlockSpec((TB, K), lambda i: (i, 0)),
                # Weights & bias: constant index_map -> fetched once, VMEM-resident.
                pl.BlockSpec((K, LANES), lambda i: (0, 0)),
                pl.BlockSpec((1, LANES), lambda i: (0, 0)),
            ],
            # Transposed output: batch maps to lanes, only 16 rows of writeback.
            out_specs=pl.BlockSpec((N_SUB, TB), lambda i: (0, i)),
        ),
        compiler_params=pltpu.CompilerParams(
            # Batch tiles are independent: shard across TensorCores (v7x megacore).
            dimension_semantics=("parallel",),
        ),
        cost_estimate=pl.CostEstimate(
            flops=2 * B * K * LANES,
            transcendentals=0,
            bytes_accessed=(B * K + K * LANES + N_SUB * B) * x.dtype.itemsize,
        ),
    )(x, w_p, b_p)

    # Tiny epilogue: (16, B) -> (B, n_out); ~100 B/row vs ~3.1 KB/row of x reads.
    return out_t[:n_out, :].T


if __name__ == "__main__":
    key = jax.random.PRNGKey(0)
    k_w, k_x, k_x2 = jax.random.split(key, 3)

    # Parameter init matching the module: weights = randn(784,10)/sqrt(784), bias = 0.
    weights = jax.random.normal(k_w, (784, 10), dtype=jnp.float32) / math.sqrt(784.0)
    bias = jnp.zeros((10,), dtype=jnp.float32)
    w_p, b_p = prepare_params(weights, bias)      # padded once, at init

    # Small batch of flattened 28x28 "images" -- single exact tile path.
    x = jax.random.normal(k_x, (8, 784), dtype=jnp.float32)
    out = jax.block_until_ready(linear_regression(x, w_p, b_p))
    ref = jnp.dot(x, weights, precision=lax.Precision.HIGHEST) + bias
    assert out.shape == (8, 10)
    assert jnp.allclose(out, ref, atol=1e-4, rtol=1e-4)

    # Multi-tile path with a ragged last block (B not a multiple of the tile).
    x2 = jax.random.normal(k_x2, (300, 784), dtype=jnp.float32)
    out2 = jax.block_until_ready(linear_regression(x2, w_p, b_p, tb_max=128))
    ref2 = jnp.dot(x2, weights, precision=lax.Precision.HIGHEST) + bias
    assert out2.shape == (300, 10)
    assert jnp.allclose(out2, ref2, atol=1e-4, rtol=1e-4)

    print("KERNEL_OK")
</pallas_src>

<mosaic_0001>
module attributes {stable_mosaic.version = 11 : i64} {
  func.func @_linreg_kernel(%arg0: i32, %arg1: memref<8x784xf32, #tpu.memory_space<vmem>>, %arg2: memref<784x128xf32, #tpu.memory_space<vmem>>, %arg3: memref<1x128xf32, #tpu.memory_space<vmem>>, %arg4: memref<16x8xf32, #tpu.memory_space<vmem>>) attributes {dimension_semantics = [#tpu.dimension_semantics<parallel>], iteration_bounds = array<i64: 1>, scalar_prefetch = 0 : i64, scratch_operands = 0 : i64, tpu.core_type = #tpu.core_type<tc>, window_params = [{transform_indices = @transform_0, window_bounds = array<i64: 8, 784>}, {pipeline_mode = #tpu.pipeline_mode<synchronous>, transform_indices = @transform_1, window_bounds = array<i64: 784, 128>}, {pipeline_mode = #tpu.pipeline_mode<synchronous>, transform_indices = @transform_2, window_bounds = array<i64: 1, 128>}, {transform_indices = @transform_3, window_bounds = array<i64: 16, 8>}]} {
    %c0 = arith.constant 0 : index
    %c0_0 = arith.constant 0 : index
    %0 = vector.load %arg1[%c0, %c0_0] : memref<8x784xf32, #tpu.memory_space<vmem>>, vector<8x784xf32>
    %c0_1 = arith.constant 0 : index
    %c0_2 = arith.constant 0 : index
    %1 = vector.load %arg2[%c0_1, %c0_2] : memref<784x128xf32, #tpu.memory_space<vmem>>, vector<784x128xf32>
    %cst = arith.constant dense<0.000000e+00> : vector<8x128xf32>
    %2 = tpu.matmul %0, %1, %cst {dimension_numbers = #tpu.dot_dimension_numbers<[1], [0], [0], [1], [0, 0, 1, 1], [], []>} : vector<8x784xf32>, vector<784x128xf32>, vector<8x128xf32> -> vector<8x128xf32>
    %c0_3 = arith.constant 0 : index
    %c0_4 = arith.constant 0 : index
    %3 = vector.load %arg3[%c0_3, %c0_4] : memref<1x128xf32, #tpu.memory_space<vmem>>, vector<1x128xf32>
    %4 = vector.broadcast %3 : vector<1x128xf32> to vector<8x128xf32>
    %5 = arith.addf %2, %4 : vector<8x128xf32>
    %6 = tpu.transpose %5, [1, 0] : vector<8x128xf32> -> vector<128x8xf32>
    %7 = vector.extract_strided_slice %6 {offsets = [0, 0], sizes = [16, 8], strides = [1, 1]} : vector<128x8xf32> to vector<16x8xf32>
    %c0_5 = arith.constant 0 : index
    %c0_6 = arith.constant 0 : index
    %8 = vector.load %arg4[%c0_5, %c0_6] : memref<16x8xf32, #tpu.memory_space<vmem>>, vector<16x8xf32>
    tpu.vector_store %arg4[%c0_5, %c0_6], %7 {strides = array<i32>} : memref<16x8xf32, #tpu.memory_space<vmem>>, vector<16x8xf32>,
    return
  }
  func.func @transform_0(%arg0: i32) -> (i32, i32) {
    %c0_i32 = arith.constant 0 : i32
    %c0_i32_0 = arith.constant 0 : i32
    return %arg0, %c0_i32 : i32, i32
  }
  func.func @transform_1(%arg0: i32) -> (i32, i32) {
    %c0_i32 = arith.constant 0 : i32
    %c0_i32_0 = arith.constant 0 : i32
    %c0_i32_1 = arith.constant 0 : i32
    return %c0_i32, %c0_i32_0 : i32, i32
  }
  func.func @transform_2(%arg0: i32) -> (i32, i32) {
    %c0_i32 = arith.constant 0 : i32
    %c0_i32_0 = arith.constant 0 : i32
    %c0_i32_1 = arith.constant 0 : i32
    return %c0_i32, %c0_i32_0 : i32, i32
  }
  func.func @transform_3(%arg0: i32) -> (i32, i32) {
    %c0_i32 = arith.constant 0 : i32
    %c0_i32_0 = arith.constant 0 : i32
    return %c0_i32, %arg0 : i32, i32
  }
}

</mosaic_0001>

<llo_original>
// kernel: tpu_custom_call.1
$region0: #{tpu_custom_call.1}
  #allocation0 [shape = 'u32[]', space=smem, size = 0x4, offset = 0x4, fixed_abs, tag = 'smem constant byte address 0x4 - core index']
  #allocation1 [shape = 'u32[144,128]{1,0:T(1,128)}', space=vmem, size = 0x12000, scoped, tag = 'internal scratch']
  %s0 = inlined_call_operand.hbm [shape: f32[8,784], index: 0, kind: input, shape index: {}]
  %s1 = inlined_call_operand.hbm [shape: f32[784,128], index: 1, kind: input, shape index: {}]
  %s2 = inlined_call_operand.vmem [shape: f32[1,128], index: 2, kind: input, shape index: {}]
  %s3 = inlined_call_operand.vmem [shape: f32[16,8], index: 3, kind: output, shape index: {}]
  %s4 = sld [smem:[#allocation0]]
  $region30: #{tpu_custom_call.1} parent=0
    _
  %s6 = ssub.s32 1, %s4
  %s7 = scalar_select 0, %s6, %s4
  $region1: #{tpu_custom_call.1} parent=0
    #allocation2 [shape = 'u8[28672]{0}', space=vmem, size = 0x7000, scoped, tag = 'input window, operand 0, single buffered']
    #allocation3 [shape = 's32[1]{0}', space=sflag, size = 0x4, scoped, tag = 'scoped memory for tpu_custom_call.1']
    #allocation4 [shape = 'u8[401408]{0}', space=vmem, size = 0x62000, scoped, tag = 'input window, operand 1, single buffered']
    #allocation5 [shape = 's32[1]{0}', space=sflag, size = 0x4, scoped, tag = 'scoped memory for tpu_custom_call.1']
    %8 = vsyncpa [#allocation3], 0
    %9 = vsyncpa [#allocation5], 0
    // Predicated region
    $region2: #{tpu_custom_call.1} parent=1 // pred_check
      _
    $region3: #{tpu_custom_call.1} parent=1 // pred_check_branch
      %11 = sbr.rel (0) target = $region5
    $region4: #{tpu_custom_call.1} parent=1 // pred_region
      %s13 = ssub.s32 896, 896
      %14 = vsyncadd [#allocation3], %s13
      %s16 = sshll.u32 [#allocation2], 4
      %s17 = int_to_ptr.vmem [resolvable:$true] %s16
      %19 = dma.hbm_to_vmem [thread:$0]  %s0, 896, %s17, [#allocation3]
    $region5: #{tpu_custom_call.1} parent=1 // pred_fallthru
      _
    // Predicated region
    $region6: #{tpu_custom_call.1} parent=1 // pred_check
      _
    $region7: #{tpu_custom_call.1} parent=1 // pred_check_branch
      %21 = sbr.rel (0) target = $region9
    $region8: #{tpu_custom_call.1} parent=1 // pred_region
      %s23 = ssub.s32 12544, 12544
      %24 = vsyncadd [#allocation5], %s23
      %s25 = sshll.u32 [#allocation4], 4
      %s26 = int_to_ptr.vmem [resolvable:$true] %s25
      %31 = dma.hbm_to_vmem [thread:$0]  %s1, 12544, %s26, [#allocation5], 128, 128, 8
    $region9: #{tpu_custom_call.1} parent=1 // pred_fallthru
      _
    // Predicated region
    $region10: #{tpu_custom_call.1} parent=1 // pred_check
      _
    $region11: #{tpu_custom_call.1} parent=1 // pred_check_branch
      %33 = sbr.rel (0) target = $region13
    $region12: #{tpu_custom_call.1} parent=1 // pred_region
      _
    $region13: #{tpu_custom_call.1} parent=1 // pred_fallthru
      _
    // Predicated region
    $region14: #{tpu_custom_call.1} parent=1 // pred_check
      _
    $region15: #{tpu_custom_call.1} parent=1 // pred_check_branch
      %35 = sbr.rel (0) target = $region17
    $region16: #{tpu_custom_call.1} parent=1 // pred_region
      %36 = dma.done [#allocation3], 896
    $region17: #{tpu_custom_call.1} parent=1 // pred_fallthru
      _
    // Predicated region
    $region18: #{tpu_custom_call.1} parent=1 // pred_check
      _
    $region19: #{tpu_custom_call.1} parent=1 // pred_check_branch
      %38 = sbr.rel (0) target = $region21
    $region20: #{tpu_custom_call.1} parent=1 // pred_region
      %39 = dma.done [#allocation5], 12544
    $region21: #{tpu_custom_call.1} parent=1 // pred_fallthru
      _
    %v40 = vld [vmem:[#allocation2] sm:$0xff]
    %v41 = vld [vmem:[#allocation2 + $0x8] sm:$0xff]
    %v42 = vld [vmem:[#allocation2 + $0x10] sm:$0xff]
    %v43 = vld [vmem:[#allocation2 + $0x18] sm:$0xff]
    %v44 = vld [vmem:[#allocation2 + $0x20] sm:$0xff]
    %v45 = vld [vmem:[#allocation2 + $0x28] sm:$0xff]
    %v46 = vld [vmem:[#allocation2 + $0x30] sm:$0xff]
    %v47 = vld [vmem:[#allocation4] sm:$0xff]
    %v48 = vld [vmem:[#allocation4 + $0x8] sm:$0xff]
    %v49 = vld [vmem:[#allocation4 + $0x10] sm:$0xff]
    %v50 = vld [vmem:[#allocation4 + $0x18] sm:$0xff]
    %v51 = vld [vmem:[#allocation4 + $0x20] sm:$0xff]
    %v52 = vld [vmem:[#allocation4 + $0x28] sm:$0xff]
    %v53 = vld [vmem:[#allocation4 + $0x30] sm:$0xff]
    %v54 = vld [vmem:[#allocation4 + $0x38] sm:$0xff]
    %v55 = vld [vmem:[#allocation4 + $0x40] sm:$0xff]
    %v56 = vld [vmem:[#allocation4 + $0x48] sm:$0xff]
    %v57 = vld [vmem:[#allocation4 + $0x50] sm:$0xff]
    %v58 = vld [vmem:[#allocation4 + $0x58] sm:$0xff]
    %v59 = vld [vmem:[#allocation4 + $0x60] sm:$0xff]
    %v60 = vld [vmem:[#allocation4 + $0x68] sm:$0xff]
    %v61 = vld [vmem:[#allocation4 + $0x70] sm:$0xff]
    %v62 = vld [vmem:[#allocation4 + $0x78] sm:$0xff]
    %v63 = vld [vmem:[#allocation4 + $0x80] sm:$0xff]
    %v64 = vld [vmem:[#allocation4 + $0x88] sm:$0xff]
    %v65 = vld [vmem:[#allocation4 + $0x90] sm:$0xff]
    %v66 = vld [vmem:[#allocation4 + $0x98] sm:$0xff]
    %v67 = vld [vmem:[#allocation4 + $0xa0] sm:$0xff]
    %v68 = vld [vmem:[#allocation4 + $0xa8] sm:$0xff]
    %v69 = vld [vmem:[#allocation4 + $0xb0] sm:$0xff]
    %v70 = vld [vmem:[#allocation4 + $0xb8] sm:$0xff]
    %v71 = vld [vmem:[#allocation4 + $0xc0] sm:$0xff]
    %v72 = vld [vmem:[#allocation4 + $0xc8] sm:$0xff]
    %v73 = vld [vmem:[#allocation4 + $0xd0] sm:$0xff]
    %v74 = vld [vmem:[#allocation4 + $0xd8] sm:$0xff]
    %v75 = vld [vmem:[#allocation4 + $0xe0] sm:$0xff]
    %v76 = vld [vmem:[#allocation4 + $0xe8] sm:$0xff]
    %v77 = vld [vmem:[#allocation4 + $0xf0] sm:$0xff]
    %v78 = vld [vmem:[#allocation4 + $0xf8] sm:$0xff]
    %v79 = vld [vmem:[#allocation4 + $0x100] sm:$0xff]
    %v80 = vld [vmem:[#allocation4 + $0x108] sm:$0xff]
    %v81 = vld [vmem:[#allocation4 + $0x110] sm:$0xff]
    %v82 = vld [vmem:[#allocation4 + $0x118] sm:$0xff]
    %v83 = vld [vmem:[#allocation4 + $0x120] sm:$0xff]
    %v84 = vld [vmem:[#allocation4 + $0x128] sm:$0xff]
    %v85 = vld [vmem:[#allocation4 + $0x130] sm:$0xff]
    %v86 = vld [vmem:[#allocation4 + $0x138] sm:$0xff]
    %v87 = vld [vmem:[#allocation4 + $0x140] sm:$0xff]
    %v88 = vld [vmem:[#allocation4 + $0x148] sm:$0xff]
    %v89 = vld [vmem:[#allocation4 + $0x150] sm:$0xff]
    %v90 = vld [vmem:[#allocation4 + $0x158] sm:$0xff]
    %v91 = vld [vmem:[#allocation4 + $0x160] sm:$0xff]
    %v92 = vld [vmem:[#allocation4 + $0x168] sm:$0xff]
    %v93 = vld [vmem:[#allocation4 + $0x170] sm:$0xff]
    %v94 = vld [vmem:[#allocation4 + $0x178] sm:$0xff]
    %v95 = vld [vmem:[#allocation4 + $0x180] sm:$0xff]
    %v96 = vld [vmem:[#allocation4 + $0x188] sm:$0xff]
    %v97 = vld [vmem:[#allocation4 + $0x190] sm:$0xff]
    %v98 = vld [vmem:[#allocation4 + $0x198] sm:$0xff]
    %v99 = vld [vmem:[#allocation4 + $0x1a0] sm:$0xff]
    %v100 = vld [vmem:[#allocation4 + $0x1a8] sm:$0xff]
    %v101 = vld [vmem:[#allocation4 + $0x1b0] sm:$0xff]
    %v102 = vld [vmem:[#allocation4 + $0x1b8] sm:$0xff]
    %v103 = vld [vmem:[#allocation4 + $0x1c0] sm:$0xff]
    %v104 = vld [vmem:[#allocation4 + $0x1c8] sm:$0xff]
    %v105 = vld [vmem:[#allocation4 + $0x1d0] sm:$0xff]
    %v106 = vld [vmem:[#allocation4 + $0x1d8] sm:$0xff]
    %v107 = vld [vmem:[#allocation4 + $0x1e0] sm:$0xff]
    %v108 = vld [vmem:[#allocation4 + $0x1e8] sm:$0xff]
    %v109 = vld [vmem:[#allocation4 + $0x1f0] sm:$0xff]
    %v110 = vld [vmem:[#allocation4 + $0x1f8] sm:$0xff]
    %v111 = vld [vmem:[#allocation4 + $0x200] sm:$0xff]
    %v112 = vld [vmem:[#allocation4 + $0x208] sm:$0xff]
    %v113 = vld [vmem:[#allocation4 + $0x210] sm:$0xff]
    %v114 = vld [vmem:[#allocation4 + $0x218] sm:$0xff]
    %v115 = vld [vmem:[#allocation4 + $0x220] sm:$0xff]
    %v116 = vld [vmem:[#allocation4 + $0x228] sm:$0xff]
    %v117 = vld [vmem:[#allocation4 + $0x230] sm:$0xff]
    %v118 = vld [vmem:[#allocation4 + $0x238] sm:$0xff]
    %v119 = vld [vmem:[#allocation4 + $0x240] sm:$0xff]
    %v120 = vld [vmem:[#allocation4 + $0x248] sm:$0xff]
    %v121 = vld [vmem:[#allocation4 + $0x250] sm:$0xff]
    %v122 = vld [vmem:[#allocation4 + $0x258] sm:$0xff]
    %v123 = vld [vmem:[#allocation4 + $0x260] sm:$0xff]
    %v124 = vld [vmem:[#allocation4 + $0x268] sm:$0xff]
    %v125 = vld [vmem:[#allocation4 + $0x270] sm:$0xff]
    %v126 = vld [vmem:[#allocation4 + $0x278] sm:$0xff]
    %v127 = vld [vmem:[#allocation4 + $0x280] sm:$0xff]
    %v128 = vld [vmem:[#allocation4 + $0x288] sm:$0xff]
    %v129 = vld [vmem:[#allocation4 + $0x290] sm:$0xff]
    %v130 = vld [vmem:[#allocation4 + $0x298] sm:$0xff]
    %v131 = vld [vmem:[#allocation4 + $0x2a0] sm:$0xff]
    %v132 = vld [vmem:[#allocation4 + $0x2a8] sm:$0xff]
    %v133 = vld [vmem:[#allocation4 + $0x2b0] sm:$0xff]
    %v134 = vld [vmem:[#allocation4 + $0x2b8] sm:$0xff]
    %v135 = vld [vmem:[#allocation4 + $0x2c0] sm:$0xff]
    %v136 = vld [vmem:[#allocation4 + $0x2c8] sm:$0xff]
    %v137 = vld [vmem:[#allocation4 + $0x2d0] sm:$0xff]
    %v138 = vld [vmem:[#allocation4 + $0x2d8] sm:$0xff]
    %v139 = vld [vmem:[#allocation4 + $0x2e0] sm:$0xff]
    %v140 = vld [vmem:[#allocation4 + $0x2e8] sm:$0xff]
    %v141 = vld [vmem:[#allocation4 + $0x2f0] sm:$0xff]
    %v142 = vld [vmem:[#allocation4 + $0x2f8] sm:$0xff]
    %v143 = vld [vmem:[#allocation4 + $0x300] sm:$0xff]
    %v144 = vld [vmem:[#allocation4 + $0x308] sm:$0xff]
    %v145 = vld [vmem:[%s2] sm:$0x1]
    %v147 = vlaneseq
    %v148 = vshrl.u32 %v147, 7
    %v149 = vsub.s32 0, %v148
    %v150 = vrot.slane %v145, %v149
    %vm152 = vcmask 130048
    %v154 = vsel %vm152, %v46, 0
    %156 = vmatprep.subr.mxu0 0.0
    %157 = vmatpush1.msra.mxu0 %v62
    %158 = vmatprep.subr.mxu0 0.0
    %159 = vmatpush1.msra.mxu0 %v61
    %160 = vmatprep.subr.mxu0 0.0
    %161 = vmatpush1.msra.mxu0 %v60
    %162 = vmatprep.subr.mxu0 0.0
    %163 = vmatpush1.msra.mxu0 %v59
    %164 = vmatprep.subr.mxu0 0.0
    %165 = vmatpush1.msra.mxu0 %v58
    %166 = vmatprep.subr.mxu0 0.0
    %167 = vmatpush1.msra.mxu0 %v57
    %168 = vmatprep.subr.mxu0 0.0
    %169 = vmatpush1.msra.mxu0 %v56
    %170 = vmatprep.subr.mxu0 0.0
    %171 = vmatpush1.msra.mxu0 %v55
    %172 = vmatprep.subr.mxu0 0.0
    %173 = vmatpush1.msra.mxu0 %v54
    %174 = vmatprep.subr.mxu0 0.0
    %175 = vmatpush1.msra.mxu0 %v53
    %176 = vmatprep.subr.mxu0 0.0
    %177 = vmatpush1.msra.mxu0 %v52
    %178 = vmatprep.subr.mxu0 0.0
    %179 = vmatpush1.msra.mxu0 %v51
    %180 = vmatprep.subr.mxu0 0.0
    %181 = vmatpush1.msra.mxu0 %v50
    %182 = vmatprep.subr.mxu0 0.0
    %183 = vmatpush1.msra.mxu0 %v49
    %184 = vmatprep.subr.mxu0 0.0
    %185 = vmatpush1.msra.mxu0 %v48
    %186 = vmatprep.subr.mxu0 0.0
    %187 = vmatpush1.msra.mxu0 %v47
    %188 = vmatprep.subr.mxu0 0.0
    %189 = vmatpush2.msra.mxu0 %v78
    %190 = vmatprep.subr.mxu0 0.0
    %191 = vmatpush2.msra.mxu0 %v77
    %192 = vmatprep.subr.mxu0 0.0
    %193 = vmatpush2.msra.mxu0 %v76
    %194 = vmatprep.subr.mxu0 0.0
    %195 = vmatpush2.msra.mxu0 %v75
    %196 = vmatprep.subr.mxu0 0.0
    %197 = vmatpush2.msra.mxu0 %v74
    %198 = vmatprep.subr.mxu0 0.0
    %199 = vmatpush2.msra.mxu0 %v73
    %200 = vmatprep.subr.mxu0 0.0
    %201 = vmatpush2.msra.mxu0 %v72
    %202 = vmatprep.subr.mxu0 0.0
    %203 = vmatpush2.msra.mxu0 %v71
    %204 = vmatprep.subr.mxu0 0.0
    %205 = vmatpush2.msra.mxu0 %v70
    %206 = vmatprep.subr.mxu0 0.0
    %207 = vmatpush2.msra.mxu0 %v69
    %208 = vmatprep.subr.mxu0 0.0
    %209 = vmatpush2.msra.mxu0 %v68
    %210 = vmatprep.subr.mxu0 0.0
    %211 = vmatpush2.msra.mxu0 %v67
    %212 = vmatprep.subr.mxu0 0.0
    %213 = vmatpush2.msra.mxu0 %v66
    %214 = vmatprep.subr.mxu0 0.0
    %215 = vmatpush2.msra.mxu0 %v65
    %216 = vmatprep.subr.mxu0 0.0
    %217 = vmatpush2.msra.mxu0 %v64
    %218 = vmatprep.subr.mxu0 0.0
    %219 = vmatpush2.msra.mxu0 %v63
    %220 = vmatprep.mubr.f32.mxu0 %v41
    %221 = vmatmul.mubr.f32.gmra.mxu0 %v40
    %v222 = vpop.f32.mrf.mxu0
    %v223 = vadd.f32 %v150, %v222
    %v224 = vpop.f32.mrf.mxu0
    %225 = vdwg.mxu0
    %226 = vmatprep.subr.mxu0 0.0
    %227 = vmatpush1.msra.mxu0 %v94
    %228 = vmatprep.subr.mxu0 0.0
    %229 = vmatpush1.msra.mxu0 %v93
    %230 = vmatprep.subr.mxu0 0.0
    %231 = vmatpush1.msra.mxu0 %v92
    %232 = vmatprep.subr.mxu0 0.0
    %233 = vmatpush1.msra.mxu0 %v91
    %234 = vmatprep.subr.mxu0 0.0
    %235 = vmatpush1.msra.mxu0 %v90
    %236 = vmatprep.subr.mxu0 0.0
    %237 = vmatpush1.msra.mxu0 %v89
    %238 = vmatprep.subr.mxu0 0.0
    %239 = vmatpush1.msra.mxu0 %v88
    %240 = vmatprep.subr.mxu0 0.0
    %241 = vmatpush1.msra.mxu0 %v87
    %242 = vmatprep.subr.mxu0 0.0
    %243 = vmatpush1.msra.mxu0 %v86
    %244 = vmatprep.subr.mxu0 0.0
    %245 = vmatpush1.msra.mxu0 %v85
    %246 = vmatprep.subr.mxu0 0.0
    %247 = vmatpush1.msra.mxu0 %v84
    %248 = vmatprep.subr.mxu0 0.0
    %249 = vmatpush1.msra.mxu0 %v83
    %250 = vmatprep.subr.mxu0 0.0
    %251 = vmatpush1.msra.mxu0 %v82
    %252 = vmatprep.subr.mxu0 0.0
    %253 = vmatpush1.msra.mxu0 %v81
    %254 = vmatprep.subr.mxu0 0.0
    %255 = vmatpush1.msra.mxu0 %v80
    %256 = vmatprep.subr.mxu0 0.0
    %257 = vmatpush1.msra.mxu0 %v79
    %258 = vmatprep.subr.mxu0 0.0
    %259 = vmatpush2.msra.mxu0 %v110
    %260 = vmatprep.subr.mxu0 0.0
    %261 = vmatpush2.msra.mxu0 %v109
    %262 = vmatprep.subr.mxu0 0.0
    %263 = vmatpush2.msra.mxu0 %v108
    %264 = vmatprep.subr.mxu0 0.0
    %265 = vmatpush2.msra.mxu0 %v107
    %266 = vmatprep.subr.mxu0 0.0
    %267 = vmatpush2.msra.mxu0 %v106
    %268 = vmatprep.subr.mxu0 0.0
    %269 = vmatpush2.msra.mxu0 %v105
    %270 = vmatprep.subr.mxu0 0.0
    %271 = vmatpush2.msra.mxu0 %v104
    %272 = vmatprep.subr.mxu0 0.0
    %273 = vmatpush2.msra.mxu0 %v103
    %274 = vmatprep.subr.mxu0 0.0
    %275 = vmatpush2.msra.mxu0 %v102
    %276 = vmatprep.subr.mxu0 0.0
    %277 = vmatpush2.msra.mxu0 %v101
    %278 = vmatprep.subr.mxu0 0.0
    %279 = vmatpush2.msra.mxu0 %v100
    %280 = vmatprep.subr.mxu0 0.0
    %281 = vmatpush2.msra.mxu0 %v99
    %282 = vmatprep.subr.mxu0 0.0
    %283 = vmatpush2.msra.mxu0 %v98
    %284 = vmatprep.subr.mxu0 0.0
    %285 = vmatpush2.msra.mxu0 %v97
    %286 = vmatprep.subr.mxu0 0.0
    %287 = vmatpush2.msra.mxu0 %v96
    %288 = vmatprep.subr.mxu0 0.0
    %289 = vmatpush2.msra.mxu0 %v95
    %290 = vmatprep.mubr.f32.mxu0 %v43
    %291 = vmatmul.mubr.f32.gmra.mxu0 %v42
    %v292 = vpop.f32.mrf.mxu0
    %v293 = vadd.f32 %v223, %v292
    %v294 = vpop.f32.mrf.mxu0
    %295 = vdwg.mxu0
    %296 = vmatprep.subr.mxu0 0.0
    %297 = vmatpush1.msra.mxu0 %v126
    %298 = vmatprep.subr.mxu0 0.0
    %299 = vmatpush1.msra.mxu0 %v125
    %300 = vmatprep.subr.mxu0 0.0
    %301 = vmatpush1.msra.mxu0 %v124
    %302 = vmatprep.subr.mxu0 0.0
    %303 = vmatpush1.msra.mxu0 %v123
    %304 = vmatprep.subr.mxu0 0.0
    %305 = vmatpush1.msra.mxu0 %v122
    %306 = vmatprep.subr.mxu0 0.0
    %307 = vmatpush1.msra.mxu0 %v121
    %308 = vmatprep.subr.mxu0 0.0
    %309 = vmatpush1.msra.mxu0 %v120
    %310 = vmatprep.subr.mxu0 0.0
    %311 = vmatpush1.msra.mxu0 %v119
    %312 = vmatprep.subr.mxu0 0.0
    %313 = vmatpush1.msra.mxu0 %v118
    %314 = vmatprep.subr.mxu0 0.0
    %315 = vmatpush1.msra.mxu0 %v117
    %316 = vmatprep.subr.mxu0 0.0
    %317 = vmatpush1.msra.mxu0 %v116
    %318 = vmatprep.subr.mxu0 0.0
    %319 = vmatpush1.msra.mxu0 %v115
    %320 = vmatprep.subr.mxu0 0.0
    %321 = vmatpush1.msra.mxu0 %v114
    %322 = vmatprep.subr.mxu0 0.0
    %323 = vmatpush1.msra.mxu0 %v113
    %324 = vmatprep.subr.mxu0 0.0
    %325 = vmatpush1.msra.mxu0 %v112
    %326 = vmatprep.subr.mxu0 0.0
    %327 = vmatpush1.msra.mxu0 %v111
    %328 = vmatprep.subr.mxu0 0.0
    %329 = vmatpush2.msra.mxu0 %v142
    %330 = vmatprep.subr.mxu0 0.0
    %331 = vmatpush2.msra.mxu0 %v141
    %332 = vmatprep.subr.mxu0 0.0
    %333 = vmatpush2.msra.mxu0 %v140
    %334 = vmatprep.subr.mxu0 0.0
    %335 = vmatpush2.msra.mxu0 %v139
    %336 = vmatprep.subr.mxu0 0.0
    %337 = vmatpush2.msra.mxu0 %v138
    %338 = vmatprep.subr.mxu0 0.0
    %339 = vmatpush2.msra.mxu0 %v137
    %340 = vmatprep.subr.mxu0 0.0
    %341 = vmatpush2.msra.mxu0 %v136
    %342 = vmatprep.subr.mxu0 0.0
    %343 = vmatpush2.msra.mxu0 %v135
    %344 = vmatprep.subr.mxu0 0.0
    %345 = vmatpush2.msra.mxu0 %v134
    %346 = vmatprep.subr.mxu0 0.0
    %347 = vmatpush2.msra.mxu0 %v133
    %348 = vmatprep.subr.mxu0 0.0
    %349 = vmatpush2.msra.mxu0 %v132
    %350 = vmatprep.subr.mxu0 0.0
    %351 = vmatpush2.msra.mxu0 %v131
    %352 = vmatprep.subr.mxu0 0.0
    %353 = vmatpush2.msra.mxu0 %v130
    %354 = vmatprep.subr.mxu0 0.0
    %355 = vmatpush2.msra.mxu0 %v129
    %356 = vmatprep.subr.mxu0 0.0
    %357 = vmatpush2.msra.mxu0 %v128
    %358 = vmatprep.subr.mxu0 0.0
    %359 = vmatpush2.msra.mxu0 %v127
    %360 = vmatprep.mubr.f32.mxu0 %v45
    %361 = vmatmul.mubr.f32.gmra.mxu0 %v44
    %v362 = vpop.f32.mrf.mxu0
    %v363 = vadd.f32 %v293, %v362
    %v364 = vpop.f32.mrf.mxu0
    %365 = vdwg.mxu0
    %366 = vmatprep.subr.mxu0 0.0
    %367 = vmatpush1.msra.mxu0 0.0
    %368 = vmatprep.subr.mxu0 0.0
    %369 = vmatpush1.msra.mxu0 0.0
    %370 = vmatprep.subr.mxu0 0.0
    %371 = vmatpush1.msra.mxu0 0.0
    %372 = vmatprep.subr.mxu0 0.0
    %373 = vmatpush1.msra.mxu0 0.0
    %374 = vmatprep.subr.mxu0 0.0
    %375 = vmatpush1.msra.mxu0 0.0
    %376 = vmatprep.subr.mxu0 0.0
    %377 = vmatpush1.msra.mxu0 0.0
    %378 = vmatprep.subr.mxu0 0.0
    %379 = vmatpush1.msra.mxu0 0.0
    %380 = vmatprep.subr.mxu0 0.0
    %381 = vmatpush1.msra.mxu0 0.0
    %382 = vmatprep.subr.mxu0 0.0
    %383 = vmatpush1.msra.mxu0 0.0
    %384 = vmatprep.subr.mxu0 0.0
    %385 = vmatpush1.msra.mxu0 0.0
    %386 = vmatprep.subr.mxu0 0.0
    %387 = vmatpush1.msra.mxu0 0.0
    %388 = vmatprep.subr.mxu0 0.0
    %389 = vmatpush1.msra.mxu0 0.0
    %390 = vmatprep.subr.mxu0 0.0
    %391 = vmatpush1.msra.mxu0 0.0
    %392 = vmatprep.subr.mxu0 0.0
    %393 = vmatpush1.msra.mxu0 0.0
    %394 = vmatprep.subr.mxu0 0.0
    %395 = vmatpush1.msra.mxu0 %v144
    %396 = vmatprep.subr.mxu0 0.0
    %397 = vmatpush1.msra.mxu0 %v143
    %398 = vmatprep.subr.mxu0 0.0
    %399 = vmatpush2.msra.mxu0 0.0
    %400 = vmatprep.subr.mxu0 0.0
    %401 = vmatpush2.msra.mxu0 0.0
    %402 = vmatprep.subr.mxu0 0.0
    %403 = vmatpush2.msra.mxu0 0.0
    %404 = vmatprep.subr.mxu0 0.0
    %405 = vmatpush2.msra.mxu0 0.0
    %406 = vmatprep.subr.mxu0 0.0
    %407 = vmatpush2.msra.mxu0 0.0
    %408 = vmatprep.subr.mxu0 0.0
    %409 = vmatpush2.msra.mxu0 0.0
    %410 = vmatprep.subr.mxu0 0.0
    %411 = vmatpush2.msra.mxu0 0.0
    %412 = vmatprep.subr.mxu0 0.0
    %413 = vmatpush2.msra.mxu0 0.0
    %414 = vmatprep.subr.mxu0 0.0
    %415 = vmatpush2.msra.mxu0 0.0
    %416 = vmatprep.subr.mxu0 0.0
    %417 = vmatpush2.msra.mxu0 0.0
    %418 = vmatprep.subr.mxu0 0.0
    %419 = vmatpush2.msra.mxu0 0.0
    %420 = vmatprep.subr.mxu0 0.0
    %421 = vmatpush2.msra.mxu0 0.0
    %422 = vmatprep.subr.mxu0 0.0
    %423 = vmatpush2.msra.mxu0 0.0
    %424 = vmatprep.subr.mxu0 0.0
    %425 = vmatpush2.msra.mxu0 0.0
    %426 = vmatprep.subr.mxu0 0.0
    %427 = vmatpush2.msra.mxu0 0.0
    %428 = vmatprep.subr.mxu0 0.0
    %429 = vmatpush2.msra.mxu0 0.0
    %430 = vmatprep.mubr.f32.mxu0 0.0
    %431 = vmatmul.mubr.f32.gmra.mxu0 %v154
    %v432 = vpop.f32.mrf.mxu0
    %v433 = vadd.f32 %v363, %v432
    %v434 = vpop.f32.mrf.mxu0
    %435 = vdwg.mxu0
    %436 = vxpose.xlu0.b32.start [1/16] %v433, 128
    %437 = vxpose.xlu0.b32.cont [2/16] 0.0, 128
    %438 = vxpose.xlu0.b32.cont [3/16] 0.0, 128
    %439 = vxpose.xlu0.b32.cont [4/16] 0.0, 128
    %440 = vxpose.xlu0.b32.cont [5/16] 0.0, 128
    %441 = vxpose.xlu0.b32.cont [6/16] 0.0, 128
    %442 = vxpose.xlu0.b32.cont [7/16] 0.0, 128
    %443 = vxpose.xlu0.b32.cont [8/16] 0.0, 128
    %444 = vxpose.xlu0.b32.cont [9/16] 0.0, 128
    %445 = vxpose.xlu0.b32.cont [10/16] 0.0, 128
    %446 = vxpose.xlu0.b32.cont [11/16] 0.0, 128
    %447 = vxpose.xlu0.b32.cont [12/16] 0.0, 128
    %448 = vxpose.xlu0.b32.cont [13/16] 0.0, 128
    %449 = vxpose.xlu0.b32.cont [14/16] 0.0, 128
    %450 = vxpose.xlu0.b32.cont [15/16] 0.0, 128
    %451 = vxpose.xlu0.b32.end [16/16] 0.0, 128
    %v452 = vpop.trf.xlu0
    %v453 = vpop.trf.xlu0
    %v454 = vpop.trf.xlu0
    %v455 = vpop.trf.xlu0
    %v456 = vpop.trf.xlu0
    %v457 = vpop.trf.xlu0
    %v458 = vpop.trf.xlu0
    %v459 = vpop.trf.xlu0
    %v460 = vpop.trf.xlu0
    %v461 = vpop.trf.xlu0
    %v462 = vpop.trf.xlu0
    %v463 = vpop.trf.xlu0
    %v464 = vpop.trf.xlu0
    %v465 = vpop.trf.xlu0
    %v466 = vpop.trf.xlu0
    %v467 = vpop.trf.xlu0
    %vm468 = vcmask 64512
    %469 = vst.msk [vmem:[%s3] sm:$0xff] %vm468, %v452
    %470 = vst.msk [vmem:[%s3 + $0x8] sm:$0xff] %vm468, %v453
    // Predicated region
    $region22: #{tpu_custom_call.1} parent=1 // pred_check
      _
    $region23: #{tpu_custom_call.1} parent=1 // pred_check_branch
      %472 = sbr.rel (0) target = $region25
    $region24: #{tpu_custom_call.1} parent=1 // pred_region
      _
    $region25: #{tpu_custom_call.1} parent=1 // pred_fallthru
      _
    // Predicated region
    $region26: #{tpu_custom_call.1} parent=1 // pred_check
      _
    $region27: #{tpu_custom_call.1} parent=1 // pred_check_branch
      %474 = sbr.rel (0) target = $region29
    $region28: #{tpu_custom_call.1} parent=1 // pred_region
      _
    $region29: #{tpu_custom_call.1} parent=1 // pred_fallthru
      _
    %475 = vsyncpa [#allocation3], 1
    %476 = vsyncpa [#allocation5], 1

</llo_original>
